<compile_context>
chip_gen: v7x
topology: tpu7x:2x2x1
jax: 0.10.0
libtpu: 0.0.40
codegen_flags: <defaults>
</compile_context>

<pallas_src>
import math
import functools

import jax
import jax.numpy as jnp
from jax.experimental import pallas as pl
from jax.experimental.pallas import tpu as pltpu

_SQRT2 = math.sqrt(2.0)
_NEG_SLOPE = 0.2


def _equal_linear_kernel_bias(x_ref, wt_ref, b_ref, o_ref, *, scale, lr_mul,
                              use_activation):
    # x: (TM, K) native dtype, wt: (K, TN) pre-transposed weight tile.
    acc = jnp.dot(x_ref[...], wt_ref[...],
                  preferred_element_type=jnp.float32)        # (TM, TN) f32
    out = acc * scale                                        # fold scale here
    out = out + b_ref[...].astype(jnp.float32) * lr_mul      # (1, TN) broadcast
    if use_activation:
        # fused_leaky_relu: leaky_relu(x + b, 0.2) * sqrt(2)
        out = jnp.maximum(out, _NEG_SLOPE * out) * _SQRT2
    o_ref[...] = out.astype(o_ref.dtype)


def _equal_linear_kernel_nobias(x_ref, wt_ref, o_ref, *, scale, use_activation):
    acc = jnp.dot(x_ref[...], wt_ref[...],
                  preferred_element_type=jnp.float32)
    out = acc * scale
    if use_activation:
        out = jnp.maximum(out, _NEG_SLOPE * out) * _SQRT2
    o_ref[...] = out.astype(o_ref.dtype)


def equal_linear(x, weight, bias=None, *, lr_mul=1.0, activation=None,
                 tm=512, tn=512):
    """Pallas forward pass of EqualLinear.

    x:      (..., in_dim)      -- arbitrary leading batch dims
    weight: (out_dim, in_dim)  -- PyTorch nn.Linear convention
    bias:   (out_dim,) or None
    """
    orig_shape = x.shape
    in_dim = orig_shape[-1]
    out_dim = weight.shape[0]
    x2d = x.reshape(-1, in_dim)
    batch = x2d.shape[0]
    scale = (1.0 / math.sqrt(in_dim)) * lr_mul

    # Pre-transpose once in the wrapper (plain XLA op) so the kernel sees a
    # (K, N) operand: contraction feeds the MXU directly, out_dim on lanes.
    w_t = weight.T  # (in_dim, out_dim)

    # Tile sizes: full dim when small (satisfies the (8,128) rule via
    # "equals full array dim"), otherwise 512 (multiple of 8/128, MXU-aligned,
    # and comfortably within v7x's 64 MiB VMEM when double-buffered).
    TM = batch if batch <= tm else tm
    TN = out_dim if out_dim <= tn else tn
    grid = (pl.cdiv(batch, TM), pl.cdiv(out_dim, TN))

    itemsize = jnp.dtype(x.dtype).itemsize
    cost = pl.CostEstimate(
        flops=2 * batch * in_dim * out_dim,
        transcendentals=0,
        bytes_accessed=(batch * in_dim * itemsize
                        + out_dim * in_dim * jnp.dtype(weight.dtype).itemsize
                        + batch * out_dim * itemsize))

    x_spec = pl.BlockSpec((TM, in_dim), lambda i, j: (i, 0))
    w_spec = pl.BlockSpec((in_dim, TN), lambda i, j: (0, j))
    o_spec = pl.BlockSpec((TM, TN), lambda i, j: (i, j))

    cparams = pltpu.CompilerParams(
        dimension_semantics=("parallel", "parallel"))

    out_shape = jax.ShapeDtypeStruct((batch, out_dim), x.dtype)
    use_act = activation is not None

    if bias is not None:
        b2d = bias.reshape(1, out_dim)
        b_spec = pl.BlockSpec((1, TN), lambda i, j: (0, j))
        kernel = functools.partial(_equal_linear_kernel_bias, scale=scale,
                                   lr_mul=lr_mul, use_activation=use_act)
        out = pl.pallas_call(
            kernel,
            out_shape=out_shape,
            grid=grid,
            in_specs=[x_spec, w_spec, b_spec],
            out_specs=o_spec,
            compiler_params=cparams,
            cost_estimate=cost,
        )(x2d, w_t, b2d)
    else:
        kernel = functools.partial(_equal_linear_kernel_nobias, scale=scale,
                                   use_activation=use_act)
        out = pl.pallas_call(
            kernel,
            out_shape=out_shape,
            grid=grid,
            in_specs=[x_spec, w_spec],
            out_specs=o_spec,
            compiler_params=cparams,
            cost_estimate=cost,
        )(x2d, w_t)

    return out.reshape(orig_shape[:-1] + (out_dim,))


def _reference(x, weight, bias, *, lr_mul=1.0, activation=None):
    in_dim = x.shape[-1]
    scale = (1.0 / math.sqrt(in_dim)) * lr_mul
    out = x @ (weight * scale).T
    if bias is not None:
        out = out + bias * lr_mul
    if activation is not None:
        out = jnp.where(out >= 0.0, out, 0.2 * out) * math.sqrt(2.0)
    return out


if __name__ == "__main__":
    key = jax.random.PRNGKey(0)
    k_x, k_w = jax.random.split(key)

    batch, in_dim, out_dim = 8, 32, 64
    lr_mul = 0.01
    bias_init = 0.0

    # Deterministic parameter init mirroring __init__:
    #   weight = randn(out_dim, in_dim) / lr_mul ; bias = full(out_dim, bias_init)
    x = jax.random.normal(k_x, (batch, in_dim), dtype=jnp.float32)
    weight = jax.random.normal(k_w, (out_dim, in_dim), dtype=jnp.float32) / lr_mul
    bias = jnp.full((out_dim,), bias_init, dtype=jnp.float32)

    # Path 1: activation='fused_lrelu' (the mapping-network path in StyleGAN2)
    out_act = equal_linear(x, weight, bias, lr_mul=lr_mul,
                           activation="fused_lrelu")
    jax.block_until_ready(out_act)
    ref_act = _reference(x, weight, bias, lr_mul=lr_mul,
                         activation="fused_lrelu")

    # Path 2: plain linear (no activation)
    out_lin = equal_linear(x, weight, bias, lr_mul=lr_mul, activation=None)
    jax.block_until_ready(out_lin)
    ref_lin = _reference(x, weight, bias, lr_mul=lr_mul, activation=None)

    # Path 3: no bias (exercise the bias-free kernel variant)
    out_nb = equal_linear(x, weight, None, lr_mul=lr_mul, activation=None)
    jax.block_until_ready(out_nb)
    ref_nb = _reference(x, weight, None, lr_mul=lr_mul, activation=None)

    # Path 4: 3-D input (latent codes of shape (batch, n_latent, dim))
    x3d = jax.random.normal(k_x, (2, 4, in_dim), dtype=jnp.float32)
    out_3d = equal_linear(x3d, weight, bias, lr_mul=lr_mul,
                          activation="fused_lrelu")
    jax.block_until_ready(out_3d)
    ref_3d = _reference(x3d, weight, bias, lr_mul=lr_mul,
                        activation="fused_lrelu")

    assert jnp.allclose(out_act, ref_act, atol=1e-4, rtol=1e-4)
    assert jnp.allclose(out_lin, ref_lin, atol=1e-4, rtol=1e-4)
    assert jnp.allclose(out_nb, ref_nb, atol=1e-4, rtol=1e-4)
    assert jnp.allclose(out_3d, ref_3d, atol=1e-4, rtol=1e-4)

    print("KERNEL_OK")
</pallas_src>

<mosaic_0001>
module attributes {stable_mosaic.version = 11 : i64} {
  func.func @_equal_linear_kernel_bias(%arg0: i32, %arg1: i32, %arg2: memref<8x32xf32, #tpu.memory_space<vmem>>, %arg3: memref<32x64xf32, #tpu.memory_space<vmem>>, %arg4: memref<1x64xf32, #tpu.memory_space<vmem>>, %arg5: memref<8x64xf32, #tpu.memory_space<vmem>>) attributes {dimension_semantics = [#tpu.dimension_semantics<parallel>, #tpu.dimension_semantics<parallel>], iteration_bounds = array<i64: 1, 1>, scalar_prefetch = 0 : i64, scratch_operands = 0 : i64, tpu.core_type = #tpu.core_type<tc>, window_params = [{transform_indices = @transform_0, window_bounds = array<i64: 8, 32>}, {transform_indices = @transform_1, window_bounds = array<i64: 32, 64>}, {transform_indices = @transform_2, window_bounds = array<i64: 1, 64>}, {transform_indices = @transform_3, window_bounds = array<i64: 8, 64>}]} {
    %c0 = arith.constant 0 : index
    %c0_0 = arith.constant 0 : index
    %0 = vector.load %arg2[%c0, %c0_0] : memref<8x32xf32, #tpu.memory_space<vmem>>, vector<8x32xf32>
    %c0_1 = arith.constant 0 : index
    %c0_2 = arith.constant 0 : index
    %1 = vector.load %arg3[%c0_1, %c0_2] : memref<32x64xf32, #tpu.memory_space<vmem>>, vector<32x64xf32>
    %cst = arith.constant dense<0.000000e+00> : vector<8x64xf32>
    %2 = tpu.matmul %0, %1, %cst {dimension_numbers = #tpu.dot_dimension_numbers<[1], [0], [0], [1], [0, 0, 1, 1], [], []>} : vector<8x32xf32>, vector<32x64xf32>, vector<8x64xf32> -> vector<8x64xf32>
    %cst_3 = arith.constant 0.00176776689 : f32
    %3 = vector.broadcast %cst_3 : f32 to vector<8x64xf32>
    %4 = arith.mulf %2, %3 : vector<8x64xf32>
    %c0_4 = arith.constant 0 : index
    %c0_5 = arith.constant 0 : index
    %5 = vector.load %arg4[%c0_4, %c0_5] : memref<1x64xf32, #tpu.memory_space<vmem>>, vector<1x64xf32>
    %cst_6 = arith.constant 0.00999999977 : f32
    %6 = vector.broadcast %cst_6 : f32 to vector<1x64xf32>
    %7 = arith.mulf %5, %6 : vector<1x64xf32>
    %8 = vector.broadcast %7 : vector<1x64xf32> to vector<8x64xf32>
    %9 = arith.addf %4, %8 : vector<8x64xf32>
    %cst_7 = arith.constant 2.000000e-01 : f32
    %10 = vector.broadcast %cst_7 : f32 to vector<8x64xf32>
    %11 = arith.mulf %10, %9 : vector<8x64xf32>
    %12 = arith.maximumf %9, %11 : vector<8x64xf32>
    %cst_8 = arith.constant 1.41421354 : f32
    %13 = vector.broadcast %cst_8 : f32 to vector<8x64xf32>
    %14 = arith.mulf %12, %13 : vector<8x64xf32>
    %c0_9 = arith.constant 0 : index
    %c0_10 = arith.constant 0 : index
    %15 = vector.load %arg5[%c0_9, %c0_10] : memref<8x64xf32, #tpu.memory_space<vmem>>, vector<8x64xf32>
    tpu.vector_store %arg5[%c0_9, %c0_10], %14 {strides = array<i32>} : memref<8x64xf32, #tpu.memory_space<vmem>>, vector<8x64xf32>,
    return
  }
  func.func @transform_0(%arg0: i32, %arg1: i32) -> (i32, i32) {
    %c0_i32 = arith.constant 0 : i32
    %c0_i32_0 = arith.constant 0 : i32
    return %arg0, %c0_i32 : i32, i32
  }
  func.func @transform_1(%arg0: i32, %arg1: i32) -> (i32, i32) {
    %c0_i32 = arith.constant 0 : i32
    %c0_i32_0 = arith.constant 0 : i32
    return %c0_i32, %arg1 : i32, i32
  }
  func.func @transform_2(%arg0: i32, %arg1: i32) -> (i32, i32) {
    %c0_i32 = arith.constant 0 : i32
    %c0_i32_0 = arith.constant 0 : i32
    return %c0_i32, %arg1 : i32, i32
  }
  func.func @transform_3(%arg0: i32, %arg1: i32) -> (i32, i32) {
    %c0_i32 = arith.constant 0 : i32
    return %arg0, %arg1 : i32, i32
  }
}

</mosaic_0001>

<llo_original>
// kernel: tpu_custom_call.1
$region0: #{tpu_custom_call.1}
  #allocation0 [shape = 'u32[]', space=smem, size = 0x4, offset = 0x4, fixed_abs, tag = 'smem constant byte address 0x4 - core index']
  #allocation1 [shape = 'u32[144,128]{1,0:T(1,128)}', space=vmem, size = 0x12000, scoped, tag = 'internal scratch']
  %s0 = inlined_call_operand.hbm [shape: f32[8,32], index: 0, kind: input, shape index: {}]
  %s1 = inlined_call_operand.hbm [shape: f32[32,64], index: 1, kind: input, shape index: {}]
  %s2 = inlined_call_operand.vmem [shape: f32[1,64], index: 2, kind: input, shape index: {}]
  %s3 = inlined_call_operand.hbm [shape: f32[8,64], index: 3, kind: output, shape index: {}]
  %s4 = sld [smem:[#allocation0]]
  $region30: #{tpu_custom_call.1} parent=0
    _
  %s6 = ssub.s32 1, %s4
  %s7 = scalar_select 0, %s6, %s4
  $region1: #{tpu_custom_call.1} parent=0
    #allocation2 [shape = 'u8[4096]{0}', space=vmem, size = 0x1000, scoped, tag = 'input window, operand 0, single buffered']
    #allocation3 [shape = 's32[1]{0}', space=sflag, size = 0x4, scoped, tag = 'scoped memory for tpu_custom_call.1']
    #allocation4 [shape = 's32[1]{0}', space=sflag, size = 0x4, scoped, tag = 'scoped memory for tpu_custom_call.1']
    #allocation5 [shape = 'u8[16384]{0}', space=vmem, size = 0x4000, scoped, tag = 'input window, operand 1, single buffered']
    #allocation6 [shape = 's32[1]{0}', space=sflag, size = 0x4, scoped, tag = 'scoped memory for tpu_custom_call.1']
    #allocation7 [shape = 'u8[4096]{0}', space=vmem, size = 0x1000, scoped, tag = 'output window, operand 0, single buffered']
    %8 = vsyncpa [#allocation3], 0
    %9 = vsyncpa [#allocation6], 0
    %10 = vsyncpa [#allocation4], 0
    // Predicated region
    $region2: #{tpu_custom_call.1} parent=1 // pred_check
      _
    $region3: #{tpu_custom_call.1} parent=1 // pred_check_branch
      %12 = sbr.rel (0) target = $region5
    $region4: #{tpu_custom_call.1} parent=1 // pred_region
      %s14 = ssub.s32 128, 128
      %15 = vsyncadd [#allocation3], %s14
      %s17 = sshll.u32 [#allocation2], 4
      %s18 = int_to_ptr.vmem [resolvable:$true] %s17
      %20 = dma.hbm_to_vmem [thread:$0]  %s0, 128, %s18, [#allocation3]
    $region5: #{tpu_custom_call.1} parent=1 // pred_fallthru
      _
    // Predicated region
    $region6: #{tpu_custom_call.1} parent=1 // pred_check
      _
    $region7: #{tpu_custom_call.1} parent=1 // pred_check_branch
      %22 = sbr.rel (0) target = $region9
    $region8: #{tpu_custom_call.1} parent=1 // pred_region
      %s24 = ssub.s32 512, 512
      %25 = vsyncadd [#allocation6], %s24
      %s26 = sshll.u32 [#allocation5], 4
      %s27 = int_to_ptr.vmem [resolvable:$true] %s26
      %32 = dma.hbm_to_vmem [thread:$0]  %s1, 512, %s27, [#allocation6], 128, 128, 8
    $region9: #{tpu_custom_call.1} parent=1 // pred_fallthru
      _
    // Predicated region
    $region10: #{tpu_custom_call.1} parent=1 // pred_check
      _
    $region11: #{tpu_custom_call.1} parent=1 // pred_check_branch
      %34 = sbr.rel (0) target = $region13
    $region12: #{tpu_custom_call.1} parent=1 // pred_region
      _
    $region13: #{tpu_custom_call.1} parent=1 // pred_fallthru
      _
    // Predicated region
    $region14: #{tpu_custom_call.1} parent=1 // pred_check
      _
    $region15: #{tpu_custom_call.1} parent=1 // pred_check_branch
      %36 = sbr.rel (0) target = $region17
    $region16: #{tpu_custom_call.1} parent=1 // pred_region
      %37 = dma.done [#allocation3], 128
    $region17: #{tpu_custom_call.1} parent=1 // pred_fallthru
      _
    // Predicated region
    $region18: #{tpu_custom_call.1} parent=1 // pred_check
      _
    $region19: #{tpu_custom_call.1} parent=1 // pred_check_branch
      %39 = sbr.rel (0) target = $region21
    $region20: #{tpu_custom_call.1} parent=1 // pred_region
      %40 = dma.done [#allocation6], 512
    $region21: #{tpu_custom_call.1} parent=1 // pred_fallthru
      _
    %v41 = vld [vmem:[#allocation2] sm:$0xff]
    %v42 = vld [vmem:[#allocation5] sm:$0xff]
    %v43 = vld [vmem:[#allocation5 + $0x8] sm:$0xff]
    %v44 = vld [vmem:[#allocation5 + $0x10] sm:$0xff]
    %v45 = vld [vmem:[#allocation5 + $0x18] sm:$0xff]
    %vm46 = vcmask 261120
    %v48 = vsel %vm46, %v41, 0
    %50 = vmatprep.subr.mxu0 0.0
    %51 = vmatpush1.msra.mxu0 %v42
    %52 = vmatprep.subr.mxu0 0.0
    %53 = vmatpush1.msra.mxu0 %v43
    %54 = vmatprep.subr.mxu0 0.0
    %55 = vmatpush1.msra.mxu0 %v44
    %56 = vmatprep.subr.mxu0 0.0
    %57 = vmatpush1.msra.mxu0 %v45
    %58 = vmatprep.subr.mxu0 0.0
    %59 = vmatpush1.msra.mxu0 0.0
    %60 = vmatprep.subr.mxu0 0.0
    %61 = vmatpush1.msra.mxu0 0.0
    %62 = vmatprep.subr.mxu0 0.0
    %63 = vmatpush1.msra.mxu0 0.0
    %64 = vmatprep.subr.mxu0 0.0
    %65 = vmatpush1.msra.mxu0 0.0
    %66 = vmatprep.subr.mxu0 0.0
    %67 = vmatpush1.msra.mxu0 0.0
    %68 = vmatprep.subr.mxu0 0.0
    %69 = vmatpush1.msra.mxu0 0.0
    %70 = vmatprep.subr.mxu0 0.0
    %71 = vmatpush1.msra.mxu0 0.0
    %72 = vmatprep.subr.mxu0 0.0
    %73 = vmatpush1.msra.mxu0 0.0
    %74 = vmatprep.subr.mxu0 0.0
    %75 = vmatpush1.msra.mxu0 0.0
    %76 = vmatprep.subr.mxu0 0.0
    %77 = vmatpush1.msra.mxu0 0.0
    %78 = vmatprep.subr.mxu0 0.0
    %79 = vmatpush1.msra.mxu0 0.0
    %80 = vmatprep.subr.mxu0 0.0
    %81 = vmatpush1.msra.mxu0 0.0
    %82 = vmatprep.subr.mxu0 0.0
    %83 = vmatpush1.msra.mxu0 0.0
    %84 = vmatprep.subr.mxu0 0.0
    %85 = vmatpush1.msra.mxu0 0.0
    %86 = vmatprep.subr.mxu0 0.0
    %87 = vmatpush1.msra.mxu0 0.0
    %88 = vmatprep.subr.mxu0 0.0
    %89 = vmatpush1.msra.mxu0 0.0
    %90 = vmatprep.subr.mxu0 0.0
    %91 = vmatpush1.msra.mxu0 0.0
    %92 = vmatprep.subr.mxu0 0.0
    %93 = vmatpush1.msra.mxu0 0.0
    %94 = vmatprep.subr.mxu0 0.0
    %95 = vmatpush1.msra.mxu0 0.0
    %96 = vmatprep.subr.mxu0 0.0
    %97 = vmatpush1.msra.mxu0 0.0
    %98 = vmatprep.subr.mxu0 0.0
    %99 = vmatpush1.msra.mxu0 0.0
    %100 = vmatprep.subr.mxu0 0.0
    %101 = vmatpush1.msra.mxu0 0.0
    %102 = vmatprep.subr.mxu0 0.0
    %103 = vmatpush1.msra.mxu0 0.0
    %104 = vmatprep.subr.mxu0 0.0
    %105 = vmatpush1.msra.mxu0 0.0
    %106 = vmatprep.subr.mxu0 0.0
    %107 = vmatpush1.msra.mxu0 0.0
    %108 = vmatprep.subr.mxu0 0.0
    %109 = vmatpush1.msra.mxu0 0.0
    %110 = vmatprep.subr.mxu0 0.0
    %111 = vmatpush1.msra.mxu0 0.0
    %112 = vmatprep.subr.mxu0 0.0
    %113 = vmatpush1.msra.mxu0 0.0
    %114 = vmatprep.mubr.f32.mxu0 0.0
    %115 = vmatmul.mubr.f32.gmra.mrb[0].mxu0 %v48
    %v116 = vpop.f32.mrb[0].mxu0
    %v117 = vadd.f32 0.0, %v116
    %v118 = vpop.f32.mrb[0].mxu0
    %119 = vdwg.mxu0
    %v120 = vmul.f32 %v117, 0.0017677669
    %v121 = vld [vmem:[%s2] sm:$0x1]
    %v122 = vmul.f32 %v121, 0.01
    %v124 = vlaneseq
    %v125 = vshrl.u32 %v124, 7
    %v126 = vsub.s32 0, %v125
    %v127 = vrot.slane %v122, %v126
    %v129 = vadd.f32 %v120, %v127
    %v130 = vmul.f32 %v129, 0.2
    %v131 = vmax.f32 %v129, %v130
    %v132 = vmul.f32 %v131, 1.4142135
    %vm133 = vcmask 523264
    %134 = vst.msk [vmem:[#allocation7] sm:$0xff] %vm133, %v132
    // Predicated region
    $region22: #{tpu_custom_call.1} parent=1 // pred_check
      _
    $region23: #{tpu_custom_call.1} parent=1 // pred_check_branch
      %136 = sbr.rel (0) target = $region25
    $region24: #{tpu_custom_call.1} parent=1 // pred_region
      %s138 = ssub.s32 128, 128
      %139 = vsyncadd [#allocation4], %s138
      %s141 = sshll.u32 [#allocation7], 4
      %s142 = int_to_ptr.vmem [resolvable:$true] %s141
      %144 = dma.vmem_to_hbm [thread:$0]  %s142, 128, %s3, [#allocation4]
    $region25: #{tpu_custom_call.1} parent=1 // pred_fallthru
      _
    // Predicated region
    $region26: #{tpu_custom_call.1} parent=1 // pred_check
      _
    $region27: #{tpu_custom_call.1} parent=1 // pred_check_branch
      %146 = sbr.rel (0) target = $region29
    $region28: #{tpu_custom_call.1} parent=1 // pred_region
      %147 = dma.done [#allocation4], 128
    $region29: #{tpu_custom_call.1} parent=1 // pred_fallthru
      _
    %148 = vsyncpa [#allocation3], 1
    %149 = vsyncpa [#allocation6], 1
    %150 = vsyncpa [#allocation4], 1

</llo_original>
